<compile_context>
chip_gen: v6e
topology: v6e:2x2x1
jax: 0.10.0
libtpu: 0.0.40
codegen_flags: <defaults>
</compile_context>

<pallas_src>
import jax
import jax.numpy as jnp
from jax.experimental import pallas as pl
from jax.experimental.pallas import tpu as pltpu


def _make_kernel(tile_r, hw, rows, use_weight, fold_lanes):
    """Per-tile kernel factory.

    pred/gt blocks: (tile_r, hw) contiguous row tiles (row r = b*J + j).
    weight block:   (tile_r, 1) per-tile slice.
    output block:   (8, 128) lane-folded partial (or (8, hw) if hw % 128 != 0).
    """
    needs_mask = (rows % tile_r) != 0          # only the ragged-last-tile case
    row_groups = tile_r // 8
    lane_groups = (hw // 128) if fold_lanes else 1

    def kernel(*refs):
        if use_weight:
            pred_ref, gt_ref, w_ref, part_ref = refs
        else:
            pred_ref, gt_ref, part_ref = refs

        d = pred_ref[...].astype(jnp.float32) - gt_ref[...].astype(jnp.float32)
        if use_weight:
            d = d * w_ref[...].astype(jnp.float32)          # (tile_r,1) bcast
        d2 = d * d

        if needs_mask:
            # Zero out-of-range rows of the last partial tile instead of
            # padding the inputs in HBM.  jnp.where selects, so garbage (even
            # NaN) in the OOB region cannot leak into the sum.
            i = pl.program_id(0)
            row_ids = jax.lax.broadcasted_iota(jnp.int32, (tile_r, 1), 0)
            d2 = jnp.where(i * tile_r + row_ids < rows, d2, 0.0)

        # Sublane fold: 8-row groups -> pure VPU adds.  The reshape keeps every
        # element's (sublane, lane) position, so no relayout is generated.
        part = jnp.sum(d2.reshape(row_groups, 8, hw), axis=0)        # (8, hw)

        if fold_lanes:
            # Lane fold via 128-aligned static slices (vreg-column selects +
            # VPU adds, no XLU): bounds accumulator vreg pressure and cuts the
            # output writeback / trailing XLA sum to (8, 128) per block.
            acc = part[:, 0:128]
            for g in range(1, lane_groups):
                acc = acc + part[:, g * 128:(g + 1) * 128]
            part = acc

        part_ref[...] = part

    return kernel


def _pick_tile_rows(rows, hw, itemsize):
    """Row-tile size: ~8 MiB per input block to amortize the ~0.35 us/step
    overhead, aligned to the dtype's sublane packing (8 f32 / 16 bf16 / 32 i8),
    capped at 2048 rows so the lane-padded (tile_r, 128) weight block stays
    small, and >= 2 balanced blocks whenever possible so the 'parallel' grid
    axis can split across v7x's two TensorCores."""
    pack = max(8, 32 // max(itemsize, 1))
    cap = ((8 << 20) // max(hw * itemsize, 1)) // pack * pack
    cap = max(pack, min(cap, 2048))
    min_blocks = pl.cdiv(rows, cap)
    if rows >= 2 * pack:
        min_blocks = max(min_blocks, 2)
    return pl.cdiv(pl.cdiv(rows, min_blocks), pack) * pack


def joints_mse_loss(output, target, target_weight=None, use_target_weight=True):
    """output, target: (B, J, H, W); target_weight: (B, J, 1). Returns scalar f32."""
    B, J, H, W = output.shape
    HW = H * W
    rows = B * J

    # Contiguous reshapes only — no transposes, no padding, no HBM copies.
    pred = output.reshape(rows, HW)
    gt = target.reshape(rows, HW)

    tile_r = _pick_tile_rows(rows, HW, output.dtype.itemsize)
    num_blocks = pl.cdiv(rows, tile_r)          # ragged last tile masked in-kernel
    fold_lanes = (HW % 128 == 0)
    out_w = 128 if fold_lanes else HW

    in_specs = [
        pl.BlockSpec((tile_r, HW), lambda i: (i, 0)),        # pred row tile
        pl.BlockSpec((tile_r, HW), lambda i: (i, 0)),        # gt   row tile
    ]
    args = [pred, gt]
    if use_target_weight:
        # Per-tile weight block: tiny DMA per step, no in-kernel dynamic slice.
        in_specs.append(pl.BlockSpec((tile_r, 1), lambda i: (i, 0)))
        args.append(target_weight.reshape(rows, 1))

    kernel = _make_kernel(tile_r, HW, rows, use_target_weight, fold_lanes)

    partials = pl.pallas_call(
        kernel,
        out_shape=jax.ShapeDtypeStruct((num_blocks * 8, out_w), jnp.float32),
        grid=(num_blocks,),
        in_specs=in_specs,
        out_specs=pl.BlockSpec((8, out_w), lambda i: (i, 0)),
        compiler_params=pltpu.CompilerParams(
            dimension_semantics=("parallel",),        # independent row blocks
            vmem_limit_bytes=48 * 1024 * 1024),       # 2 in x 2 buf x <=8 MiB + headroom
    )(*args)

    # Single tiny cross-lane reduce + mean scaling outside the hot loop.
    return jnp.sum(partials) * jnp.float32(1.0 / (B * HW))


def joints_mse_loss_ref(output, target, target_weight, use_target_weight=True):
    """Pure-JAX reference matching the provided PyTorch module exactly."""
    B, J = output.shape[:2]
    pred = output.reshape(B, J, -1)
    gt = target.reshape(B, J, -1)
    loss = jnp.float32(0.0)
    for idx in range(J):
        hp = pred[:, idx, :]
        hg = gt[:, idx, :]
        if use_target_weight:
            w = target_weight[:, idx]  # (B, 1)
            loss += jnp.mean((hp * w - hg * w) ** 2)
        else:
            loss += jnp.mean((hp - hg) ** 2)
    return loss


if __name__ == "__main__":
    B, J, H, W = 2, 4, 16, 16
    key = jax.random.PRNGKey(0)
    k1, k2, k3 = jax.random.split(key, 3)

    output = jax.random.normal(k1, (B, J, H, W), dtype=jnp.float32)
    target = jax.random.normal(k2, (B, J, H, W), dtype=jnp.float32)
    target_weight = jax.random.uniform(k3, (B, J, 1), dtype=jnp.float32)

    # Weighted variant (the common path).
    loss = joints_mse_loss(output, target, target_weight, use_target_weight=True)
    loss = jax.block_until_ready(loss)
    ref = joints_mse_loss_ref(output, target, target_weight, use_target_weight=True)
    assert jnp.allclose(loss, ref, rtol=1e-5, atol=1e-6), (loss, ref)

    # Unweighted variant.
    loss_nw = joints_mse_loss(output, target, None, use_target_weight=False)
    loss_nw = jax.block_until_ready(loss_nw)
    ref_nw = joints_mse_loss_ref(output, target, target_weight, use_target_weight=False)
    assert jnp.allclose(loss_nw, ref_nw, rtol=1e-5, atol=1e-6), (loss_nw, ref_nw)

    print("KERNEL_OK")
</pallas_src>

<mosaic_0001>
module attributes {stable_mosaic.version = 11 : i64} {
  func.func @kernel(%arg0: i32, %arg1: memref<8x256xf32, #tpu.memory_space<vmem>>, %arg2: memref<8x256xf32, #tpu.memory_space<vmem>>, %arg3: memref<8x1xf32, #tpu.memory_space<vmem>>, %arg4: memref<8x128xf32, #tpu.memory_space<vmem>>) attributes {dimension_semantics = [#tpu.dimension_semantics<parallel>], iteration_bounds = array<i64: 1>, scalar_prefetch = 0 : i64, scratch_operands = 0 : i64, tpu.core_type = #tpu.core_type<tc>, window_params = [{transform_indices = @transform_0, window_bounds = array<i64: 8, 256>}, {transform_indices = @transform_1, window_bounds = array<i64: 8, 256>}, {transform_indices = @transform_2, window_bounds = array<i64: 8, 1>}, {transform_indices = @transform_3, window_bounds = array<i64: 8, 128>}]} {
    %c0 = arith.constant 0 : index
    %c0_0 = arith.constant 0 : index
    %0 = vector.load %arg1[%c0, %c0_0] : memref<8x256xf32, #tpu.memory_space<vmem>>, vector<8x256xf32>
    %c0_1 = arith.constant 0 : index
    %c0_2 = arith.constant 0 : index
    %1 = vector.load %arg2[%c0_1, %c0_2] : memref<8x256xf32, #tpu.memory_space<vmem>>, vector<8x256xf32>
    %2 = arith.subf %0, %1 : vector<8x256xf32>
    %c0_3 = arith.constant 0 : index
    %c0_4 = arith.constant 0 : index
    %3 = vector.load %arg3[%c0_3, %c0_4] : memref<8x1xf32, #tpu.memory_space<vmem>>, vector<8x1xf32>
    %4 = vector.broadcast %3 : vector<8x1xf32> to vector<8x256xf32>
    %5 = arith.mulf %2, %4 : vector<8x256xf32>
    %6 = arith.mulf %5, %5 : vector<8x256xf32>
    %7 = vector.shape_cast %6 : vector<8x256xf32> to vector<1x8x256xf32>
    %cst = arith.constant dense<0.000000e+00> : vector<8x256xf32>
    %8 = vector.multi_reduction <add>, %7, %cst [0] : vector<1x8x256xf32> to vector<8x256xf32>
    %9 = vector.extract_strided_slice %8 {offsets = [0, 0], sizes = [8, 128], strides = [1, 1]} : vector<8x256xf32> to vector<8x128xf32>
    %10 = vector.extract_strided_slice %8 {offsets = [0, 128], sizes = [8, 128], strides = [1, 1]} : vector<8x256xf32> to vector<8x128xf32>
    %11 = arith.addf %9, %10 : vector<8x128xf32>
    %c0_5 = arith.constant 0 : index
    %c0_6 = arith.constant 0 : index
    %12 = vector.load %arg4[%c0_5, %c0_6] : memref<8x128xf32, #tpu.memory_space<vmem>>, vector<8x128xf32>
    tpu.vector_store %arg4[%c0_5, %c0_6], %11 {strides = array<i32>} : memref<8x128xf32, #tpu.memory_space<vmem>>, vector<8x128xf32>,
    return
  }
  func.func @transform_0(%arg0: i32) -> (i32, i32) {
    %c0_i32 = arith.constant 0 : i32
    %c0_i32_0 = arith.constant 0 : i32
    return %arg0, %c0_i32 : i32, i32
  }
  func.func @transform_1(%arg0: i32) -> (i32, i32) {
    %c0_i32 = arith.constant 0 : i32
    %c0_i32_0 = arith.constant 0 : i32
    return %arg0, %c0_i32 : i32, i32
  }
  func.func @transform_2(%arg0: i32) -> (i32, i32) {
    %c0_i32 = arith.constant 0 : i32
    %c0_i32_0 = arith.constant 0 : i32
    return %arg0, %c0_i32 : i32, i32
  }
  func.func @transform_3(%arg0: i32) -> (i32, i32) {
    %c0_i32 = arith.constant 0 : i32
    %c0_i32_0 = arith.constant 0 : i32
    return %arg0, %c0_i32 : i32, i32
  }
}

</mosaic_0001>

<llo_original>
// kernel: tpu_custom_call.1
$region0: #{tpu_custom_call.1}
  #allocation0 [shape = 'u32[]', space=smem, size = 0x4, offset = 0x4, fixed_abs, tag = 'smem constant byte address 0x4 - core index']
  #allocation1 [shape = 'u32[144,128]{1,0:T(1,128)}', space=vmem, size = 0x12000, scoped, tag = 'internal scratch']
  %s0 = inlined_call_operand.hbm [shape: f32[8,256], index: 0, kind: input, shape index: {}]
  %s1 = inlined_call_operand.hbm [shape: f32[8,256], index: 1, kind: input, shape index: {}]
  %s2 = inlined_call_operand.vmem [shape: f32[8,1], index: 2, kind: input, shape index: {}]
  %s3 = inlined_call_operand.hbm [shape: f32[8,128], index: 3, kind: output, shape index: {}]
  %s4 = sld [smem:[#allocation0]]
  $region30: #{tpu_custom_call.1} parent=0
    _
  %s6 = ssub.s32 1, %s4
  %s7 = scalar_select 0, %s6, %s4
  $region1: #{tpu_custom_call.1} parent=0
    #allocation2 [shape = 'u8[8192]{0}', space=vmem, size = 0x2000, scoped, tag = 'input window, operand 0, single buffered']
    #allocation3 [shape = 's32[1]{0}', space=sflag, size = 0x4, scoped, tag = 'scoped memory for tpu_custom_call.1']
    #allocation4 [shape = 's32[1]{0}', space=sflag, size = 0x4, scoped, tag = 'scoped memory for tpu_custom_call.1']
    #allocation5 [shape = 'u8[8192]{0}', space=vmem, size = 0x2000, scoped, tag = 'input window, operand 1, single buffered']
    #allocation6 [shape = 's32[1]{0}', space=sflag, size = 0x4, scoped, tag = 'scoped memory for tpu_custom_call.1']
    #allocation7 [shape = 'u8[4096]{0}', space=vmem, size = 0x1000, scoped, tag = 'output window, operand 0, single buffered']
    %8 = vsyncpa [#allocation3], 0
    %9 = vsyncpa [#allocation6], 0
    %10 = vsyncpa [#allocation4], 0
    // Predicated region
    $region2: #{tpu_custom_call.1} parent=1 // pred_check
      _
    $region3: #{tpu_custom_call.1} parent=1 // pred_check_branch
      %12 = sbr.rel (0) target = $region5
    $region4: #{tpu_custom_call.1} parent=1 // pred_region
      %s14 = ssub.s32 256, 256
      %15 = vsyncadd [#allocation3], %s14
      %s17 = sshll.u32 [#allocation2], 4
      %s18 = int_to_ptr.vmem [resolvable:$true] %s17
      %20 = dma.hbm_to_vmem [thread:$0]  %s0, 256, %s18, [#allocation3]
    $region5: #{tpu_custom_call.1} parent=1 // pred_fallthru
      _
    // Predicated region
    $region6: #{tpu_custom_call.1} parent=1 // pred_check
      _
    $region7: #{tpu_custom_call.1} parent=1 // pred_check_branch
      %22 = sbr.rel (0) target = $region9
    $region8: #{tpu_custom_call.1} parent=1 // pred_region
      %s24 = ssub.s32 256, 256
      %25 = vsyncadd [#allocation6], %s24
      %s27 = sshll.u32 [#allocation5], 4
      %s28 = int_to_ptr.vmem [resolvable:$true] %s27
      %30 = dma.hbm_to_vmem [thread:$0]  %s1, 256, %s28, [#allocation6]
    $region9: #{tpu_custom_call.1} parent=1 // pred_fallthru
      _
    // Predicated region
    $region10: #{tpu_custom_call.1} parent=1 // pred_check
      _
    $region11: #{tpu_custom_call.1} parent=1 // pred_check_branch
      %32 = sbr.rel (0) target = $region13
    $region12: #{tpu_custom_call.1} parent=1 // pred_region
      _
    $region13: #{tpu_custom_call.1} parent=1 // pred_fallthru
      _
    // Predicated region
    $region14: #{tpu_custom_call.1} parent=1 // pred_check
      _
    $region15: #{tpu_custom_call.1} parent=1 // pred_check_branch
      %34 = sbr.rel (0) target = $region17
    $region16: #{tpu_custom_call.1} parent=1 // pred_region
      %35 = dma.done [#allocation3], 256
    $region17: #{tpu_custom_call.1} parent=1 // pred_fallthru
      _
    // Predicated region
    $region18: #{tpu_custom_call.1} parent=1 // pred_check
      _
    $region19: #{tpu_custom_call.1} parent=1 // pred_check_branch
      %37 = sbr.rel (0) target = $region21
    $region20: #{tpu_custom_call.1} parent=1 // pred_region
      %38 = dma.done [#allocation6], 256
    $region21: #{tpu_custom_call.1} parent=1 // pred_fallthru
      _
    %v39 = vld [vmem:[#allocation2] sm:$0xff]
    %v40 = vld [vmem:[#allocation2 + $0x8] sm:$0xff]
    %v41 = vld [vmem:[#allocation5] sm:$0xff]
    %v42 = vld [vmem:[#allocation5 + $0x8] sm:$0xff]
    %v43 = vsub.f32 %v39, %v41
    %v44 = vsub.f32 %v40, %v42
    %v45 = vld [vmem:[%s2] sm:$0xff]
    %47 = vset.pattern.permute.xlu0 0
    %48 = vperm.xlu0 %47, %v45
    %v49 = vpop.permute.xlu0 %48
    %v51 = vmul.f32 %v43, %v49
    %v52 = vmul.f32 %v44, %v49
    %v53 = vmul.f32 %v51, %v51
    %v54 = vmul.f32 %v52, %v52
    %v55 = vadd.f32 %v53, 0.0
    %v56 = vadd.f32 %v54, 0.0
    %v57 = vadd.f32 %v55, %v56
    %58 = vst [vmem:[#allocation7] sm:$0xff] %v57
    // Predicated region
    $region22: #{tpu_custom_call.1} parent=1 // pred_check
      _
    $region23: #{tpu_custom_call.1} parent=1 // pred_check_branch
      %60 = sbr.rel (0) target = $region25
    $region24: #{tpu_custom_call.1} parent=1 // pred_region
      %s62 = ssub.s32 128, 128
      %63 = vsyncadd [#allocation4], %s62
      %s65 = sshll.u32 [#allocation7], 4
      %s66 = int_to_ptr.vmem [resolvable:$true] %s65
      %68 = dma.vmem_to_hbm [thread:$0]  %s66, 128, %s3, [#allocation4]
    $region25: #{tpu_custom_call.1} parent=1 // pred_fallthru
      _
    // Predicated region
    $region26: #{tpu_custom_call.1} parent=1 // pred_check
      _
    $region27: #{tpu_custom_call.1} parent=1 // pred_check_branch
      %70 = sbr.rel (0) target = $region29
    $region28: #{tpu_custom_call.1} parent=1 // pred_region
      %71 = dma.done [#allocation4], 128
    $region29: #{tpu_custom_call.1} parent=1 // pred_fallthru
      _
    %72 = vsyncpa [#allocation3], 1
    %73 = vsyncpa [#allocation6], 1
    %74 = vsyncpa [#allocation4], 1

</llo_original>
